<compile_context>
chip_gen: v5e
topology: v5e:2x2
jax: 0.10.0
libtpu: 0.0.40
codegen_flags: <defaults>
</compile_context>

<pallas_src>
import functools

import jax
import jax.numpy as jnp
from jax import lax
from jax.experimental import pallas as pl
from jax.experimental.pallas import tpu as pltpu


def _round_up(x, m):
    return (x + m - 1) // m * m


def _pick_tile(s_pad):
    """Largest of {512, 256, 128} that divides the (128-padded) sequence length."""
    for t in (512, 256, 128):
        if s_pad % t == 0:
            return t
    return 128


# ----------------------------------------------------------------------------- 
# Kernel 1: fused 1x1-conv projections  (theta|g from x_this, phi from x_other)
# -----------------------------------------------------------------------------
def _proj_kernel(icp, xt_ref, xo_ref, wtg_ref, btg_ref, wph_ref, bph_ref,
                 th_ref, g_ref, ph_ref):
    xt = xt_ref[0].astype(jnp.bfloat16)                         # (TS, Cp)
    xo = xo_ref[0].astype(jnp.bfloat16)                         # (TS, Cp)

    # one wide matmul for theta & g (fills the MXU, streams xt once)
    tg = jnp.dot(xt, wtg_ref[...], preferred_element_type=jnp.float32) + btg_ref[...]
    th_ref[0] = tg[:, :icp].astype(th_ref.dtype)                # theta(x_this)
    g_ref[0] = tg[:, icp:].astype(g_ref.dtype)                  # g(x_this)

    ph = jnp.dot(xo, wph_ref[...], preferred_element_type=jnp.float32) + bph_ref[...]
    ph_ref[0] = ph.astype(ph_ref.dtype)                         # phi(x_other)


# ----------------------------------------------------------------------------- 
# Kernel 2: flash attention (online softmax) + folded W_z/BN + residual
# -----------------------------------------------------------------------------
def _flash_kernel(s_valid, tk, need_mask,
                  phi_ref, th_ref, g_ref, xt_ref, wz_ref, bz_ref,
                  o_ref, m_sc, l_sc, acc_sc):
    ki = pl.program_id(2)

    @pl.when(ki == 0)
    def _():
        m_sc[...] = jnp.full(m_sc.shape, -1e30, m_sc.dtype)
        l_sc[...] = jnp.zeros(l_sc.shape, l_sc.dtype)
        acc_sc[...] = jnp.zeros(acc_sc.shape, acc_sc.dtype)

    q = phi_ref[0]                                              # (TQ, ICp) bf16
    k = th_ref[0]                                               # (TK, ICp) bf16

    # f[i, j] = phi(x_other)[i] . theta(x_this)[j]   (bf16 MXU, f32 accumulate)
    s = lax.dot_general(q, k, (((1,), (1,)), ((), ())),
                        preferred_element_type=jnp.float32)     # (TQ, TK)

    if need_mask:
        col = ki * tk + lax.broadcasted_iota(jnp.int32, s.shape, 1)
        s = jnp.where(col < s_valid, s, jnp.float32(-1e30))     # mask padded keys

    # online softmax (un-normalized; normalization deferred to the epilogue)
    m_prev = m_sc[...]
    m_new = jnp.maximum(m_prev, jnp.max(s, axis=-1, keepdims=True))
    alpha = jnp.exp(m_prev - m_new)
    p = jnp.exp(s - m_new)                                      # (TQ, TK)
    l_sc[...] = alpha * l_sc[...] + jnp.sum(p, axis=-1, keepdims=True)
    acc_sc[...] = alpha * acc_sc[...] + jnp.dot(
        p.astype(jnp.bfloat16), g_ref[0], preferred_element_type=jnp.float32)
    m_sc[...] = m_new

    @pl.when(ki == pl.num_programs(2) - 1)
    def _():
        inv_l = pl.reciprocal(l_sc[...], approx=True)           # EUP slot, ~free
        y = (acc_sc[...] * inv_l).astype(jnp.bfloat16)          # (TQ, ICp)
        # W_z 1x1 conv with eval-mode BN affine pre-folded into wz/bz
        wy = jnp.dot(y, wz_ref[...], preferred_element_type=jnp.float32) + bz_ref[...]
        o_ref[0] = (wy + xt_ref[0]).astype(o_ref.dtype)         # residual


# ----------------------------------------------------------------------------- 
# Wrapper
# -----------------------------------------------------------------------------
def nlblock_cross(x_this, x_other, params, *, eps=1e-5):
    """x_this, x_other: (N, C, T, H, W) float32. Returns z with the same shape."""
    N, C, T, H, W = x_this.shape
    S = T * H * W
    IC = params["wg"].shape[0]                     # torch weight (IC, C)

    Cp = _round_up(C, 128)
    ICp = _round_up(IC, 128)
    S_pad = _round_up(S, 128)
    TS = _pick_tile(S_pad)                         # q-tile = k-tile = proj-tile
    n_s = S_pad // TS
    need_mask = (S_pad != S)

    # NCTHW -> channels-last (N, S_pad, Cp), zero padded
    def to_slc(x):
        x = jnp.transpose(x.reshape(N, C, S), (0, 2, 1))
        return jnp.pad(x, ((0, 0), (0, S_pad - S), (0, Cp - C)))

    xt = to_slc(x_this)
    xo = to_slc(x_other)

    # ---- weight prep (pad to 128 multiples, transpose for (row, chan) matmuls) ----
    def pad_w(w):                                  # (IC, C) -> (Cp, ICp)
        return jnp.pad(w, ((0, ICp - IC), (0, Cp - C))).T

    def pad_b(b, n):
        return jnp.pad(b, (0, n - b.shape[0])).reshape(1, n)

    w_tg = jnp.concatenate([pad_w(params["wtheta"]), pad_w(params["wg"])],
                           axis=1).astype(jnp.bfloat16)          # (Cp, 2*ICp)
    b_tg = jnp.concatenate([pad_b(params["btheta"], ICp),
                            pad_b(params["bg"], ICp)], axis=1)   # (1, 2*ICp) f32
    w_ph = pad_w(params["wphi"]).astype(jnp.bfloat16)            # (Cp, ICp)
    b_ph = pad_b(params["bphi"], ICp)                            # (1, ICp) f32

    # fold eval-mode BatchNorm (default running_mean=0, running_var=1) into W_z
    rm = params.get("bn_mean", jnp.zeros((C,), jnp.float32))
    rv = params.get("bn_var", jnp.ones((C,), jnp.float32))
    scale = params["bn_gamma"] / jnp.sqrt(rv + eps)
    wz_f = params["wz"].T * scale[None, :]                       # (IC, C)
    bz_f = (params["bz"] - rm) * scale + params["bn_beta"]       # (C,)
    wz_f = jnp.pad(wz_f, ((0, ICp - IC), (0, Cp - C))).astype(jnp.bfloat16)
    bz_f = jnp.pad(bz_f, (0, Cp - C)).reshape(1, Cp)             # f32

    # ---- kernel 1: projections ----
    theta, g_x, phi = pl.pallas_call(
        functools.partial(_proj_kernel, ICp),
        out_shape=(
            jax.ShapeDtypeStruct((N, S_pad, ICp), jnp.bfloat16),   # theta(x_this)
            jax.ShapeDtypeStruct((N, S_pad, ICp), jnp.bfloat16),   # g(x_this)
            jax.ShapeDtypeStruct((N, S_pad, ICp), jnp.bfloat16),   # phi(x_other)
        ),
        grid_spec=pltpu.PrefetchScalarGridSpec(
            num_scalar_prefetch=0,
            grid=(N, n_s),
            in_specs=[
                pl.BlockSpec((1, TS, Cp), lambda b, s: (b, s, 0)),
                pl.BlockSpec((1, TS, Cp), lambda b, s: (b, s, 0)),
                pl.BlockSpec((Cp, 2 * ICp), lambda b, s: (0, 0)),
                pl.BlockSpec((1, 2 * ICp), lambda b, s: (0, 0)),
                pl.BlockSpec((Cp, ICp), lambda b, s: (0, 0)),
                pl.BlockSpec((1, ICp), lambda b, s: (0, 0)),
            ],
            out_specs=[
                pl.BlockSpec((1, TS, ICp), lambda b, s: (b, s, 0)),
                pl.BlockSpec((1, TS, ICp), lambda b, s: (b, s, 0)),
                pl.BlockSpec((1, TS, ICp), lambda b, s: (b, s, 0)),
            ],
        ),
        compiler_params=pltpu.CompilerParams(
            dimension_semantics=("parallel", "parallel")),
    )(xt, xo, w_tg, b_tg, w_ph, b_ph)

    # ---- kernel 2: flash attention + W_z/BN + residual ----
    out = pl.pallas_call(
        functools.partial(_flash_kernel, S, TS, need_mask),
        out_shape=jax.ShapeDtypeStruct((N, S_pad, Cp), x_this.dtype),
        grid_spec=pltpu.PrefetchScalarGridSpec(
            num_scalar_prefetch=0,
            grid=(N, n_s, n_s),                                  # (batch, q-tile, k-tile)
            in_specs=[
                pl.BlockSpec((1, TS, ICp), lambda b, q, k: (b, q, 0)),  # phi  (queries)
                pl.BlockSpec((1, TS, ICp), lambda b, q, k: (b, k, 0)),  # theta (keys)
                pl.BlockSpec((1, TS, ICp), lambda b, q, k: (b, k, 0)),  # g    (values)
                pl.BlockSpec((1, TS, Cp), lambda b, q, k: (b, q, 0)),   # x_this (residual)
                pl.BlockSpec((ICp, Cp), lambda b, q, k: (0, 0)),        # folded W_z
                pl.BlockSpec((1, Cp), lambda b, q, k: (0, 0)),          # folded bias
            ],
            out_specs=pl.BlockSpec((1, TS, Cp), lambda b, q, k: (b, q, 0)),
            scratch_shapes=[
                pltpu.VMEM((TS, 1), jnp.float32),     # running max
                pltpu.VMEM((TS, 1), jnp.float32),     # running sum
                pltpu.VMEM((TS, ICp), jnp.float32),   # un-normalized accumulator
            ],
        ),
        compiler_params=pltpu.CompilerParams(
            dimension_semantics=("parallel", "parallel", "arbitrary")),
    )(phi, theta, g_x, xt, wz_f, bz_f)

    # strip padding, back to NCTHW
    out = out[:, :S, :C]
    return jnp.transpose(out, (0, 2, 1)).reshape(N, C, T, H, W)


# ----------------------------------------------------------------------------- 
# Pure-JAX reference of the PyTorch forward (embedded mode, bn_layer=True, eval BN)
# -----------------------------------------------------------------------------
def _reference(x_this, x_other, params, eps=1e-5):
    N, C, T, H, W = x_this.shape
    S = T * H * W
    xt = x_this.reshape(N, C, S)
    xo = x_other.reshape(N, C, S)
    conv1x1 = lambda x, w, b: jnp.einsum("oc,bcs->bos", w, x) + b[None, :, None]
    g_x = jnp.transpose(conv1x1(xt, params["wg"], params["bg"]), (0, 2, 1))      # (N,S,IC)
    theta = conv1x1(xt, params["wtheta"], params["btheta"])                      # (N,IC,S)
    phi = jnp.transpose(conv1x1(xo, params["wphi"], params["bphi"]), (0, 2, 1))  # (N,S,IC)
    f = jnp.einsum("bic,bcj->bij", phi, theta)                                   # (N,S,S)
    p = jax.nn.softmax(f, axis=-1)
    y = jnp.einsum("bij,bjc->bic", p, g_x)                                       # (N,S,IC)
    wy = jnp.einsum("oc,bsc->bso", params["wz"], y) + params["bz"][None, None, :]
    wy = params["bn_gamma"] * (wy / jnp.sqrt(1.0 + eps)) + params["bn_beta"]
    wy = jnp.transpose(wy, (0, 2, 1)).reshape(N, C, T, H, W)
    return wy + x_this


if __name__ == "__main__":
    # small shapes consistent with dimension=3: (N, C, T, H, W)
    N, C, T, H, W = 2, 4, 2, 4, 4
    IC = C // 2

    key = jax.random.PRNGKey(0)
    k = jax.random.split(key, 12)
    x_this = jax.random.normal(k[0], (N, C, T, H, W), jnp.float32)
    x_other = jax.random.normal(k[1], (N, C, T, H, W), jnp.float32)

    # parameter shapes match the PyTorch module; nonzero BN affine so the full
    # attention + W_z path is actually exercised (not zeroed out as at init)
    params = {
        "wg":     0.2 * jax.random.normal(k[2], (IC, C), jnp.float32),
        "bg":     0.1 * jax.random.normal(k[3], (IC,), jnp.float32),
        "wtheta": 0.2 * jax.random.normal(k[4], (IC, C), jnp.float32),
        "btheta": 0.1 * jax.random.normal(k[5], (IC,), jnp.float32),
        "wphi":   0.2 * jax.random.normal(k[6], (IC, C), jnp.float32),
        "bphi":   0.1 * jax.random.normal(k[7], (IC,), jnp.float32),
        "wz":     0.2 * jax.random.normal(k[8], (C, IC), jnp.float32),
        "bz":     0.1 * jax.random.normal(k[9], (C,), jnp.float32),
        "bn_gamma": 1.0 + 0.1 * jax.random.normal(k[10], (C,), jnp.float32),
        "bn_beta":  0.1 * jax.random.normal(k[11], (C,), jnp.float32),
    }

    z = nlblock_cross(x_this, x_other, params)
    z = jax.block_until_ready(z)

    z_ref = _reference(x_this, x_other, params)
    assert z.shape == (N, C, T, H, W)
    # bf16 matmuls + approx reciprocal => loosened tolerance vs the f32 reference
    assert jnp.allclose(z, z_ref, atol=2e-2, rtol=2e-2), "mismatch vs reference"
    print("KERNEL_OK")
</pallas_src>

<mosaic_0001>
module attributes {stable_mosaic.version = 11 : i64} {
  func.func @_proj_kernel(%arg0: i32, %arg1: i32, %arg2: memref<1x128x128xf32, #tpu.memory_space<vmem>>, %arg3: memref<1x128x128xf32, #tpu.memory_space<vmem>>, %arg4: memref<128x256xbf16, #tpu.memory_space<vmem>>, %arg5: memref<1x256xf32, #tpu.memory_space<vmem>>, %arg6: memref<128x128xbf16, #tpu.memory_space<vmem>>, %arg7: memref<1x128xf32, #tpu.memory_space<vmem>>, %arg8: memref<1x128x128xbf16, #tpu.memory_space<vmem>>, %arg9: memref<1x128x128xbf16, #tpu.memory_space<vmem>>, %arg10: memref<1x128x128xbf16, #tpu.memory_space<vmem>>) attributes {dimension_semantics = [#tpu.dimension_semantics<parallel>, #tpu.dimension_semantics<parallel>], iteration_bounds = array<i64: 2, 1>, scalar_prefetch = 0 : i64, scratch_operands = 0 : i64, tpu.core_type = #tpu.core_type<tc>, window_params = [{transform_indices = @transform_0, window_bounds = array<i64: 1, 128, 128>}, {transform_indices = @transform_1, window_bounds = array<i64: 1, 128, 128>}, {pipeline_mode = #tpu.pipeline_mode<synchronous>, transform_indices = @transform_2, window_bounds = array<i64: 128, 256>}, {pipeline_mode = #tpu.pipeline_mode<synchronous>, transform_indices = @transform_3, window_bounds = array<i64: 1, 256>}, {pipeline_mode = #tpu.pipeline_mode<synchronous>, transform_indices = @transform_4, window_bounds = array<i64: 128, 128>}, {pipeline_mode = #tpu.pipeline_mode<synchronous>, transform_indices = @transform_5, window_bounds = array<i64: 1, 128>}, {transform_indices = @transform_6, window_bounds = array<i64: 1, 128, 128>}, {transform_indices = @transform_7, window_bounds = array<i64: 1, 128, 128>}, {transform_indices = @transform_8, window_bounds = array<i64: 1, 128, 128>}]} {
    %c0 = arith.constant 0 : index
    %c0_0 = arith.constant 0 : index
    %c0_1 = arith.constant 0 : index
    %0 = vector.load %arg2[%c0, %c0_0, %c0_1] : memref<1x128x128xf32, #tpu.memory_space<vmem>>, vector<1x128x128xf32>
    %1 = vector.shape_cast %0 : vector<1x128x128xf32> to vector<128x128xf32>
    %2 = arith.truncf %1 : vector<128x128xf32> to vector<128x128xbf16>
    %c0_2 = arith.constant 0 : index
    %c0_3 = arith.constant 0 : index
    %c0_4 = arith.constant 0 : index
    %3 = vector.load %arg3[%c0_2, %c0_3, %c0_4] : memref<1x128x128xf32, #tpu.memory_space<vmem>>, vector<1x128x128xf32>
    %4 = vector.shape_cast %3 : vector<1x128x128xf32> to vector<128x128xf32>
    %5 = arith.truncf %4 : vector<128x128xf32> to vector<128x128xbf16>
    %c0_5 = arith.constant 0 : index
    %c0_6 = arith.constant 0 : index
    %6 = vector.load %arg4[%c0_5, %c0_6] : memref<128x256xbf16, #tpu.memory_space<vmem>>, vector<128x256xbf16>
    %cst = arith.constant dense<0.000000e+00> : vector<128x256xf32>
    %7 = tpu.matmul %2, %6, %cst {dimension_numbers = #tpu.dot_dimension_numbers<[1], [0], [0], [1], [0, 0, 1, 1], [], []>} : vector<128x128xbf16>, vector<128x256xbf16>, vector<128x256xf32> -> vector<128x256xf32>
    %c0_7 = arith.constant 0 : index
    %c0_8 = arith.constant 0 : index
    %8 = vector.load %arg5[%c0_7, %c0_8] : memref<1x256xf32, #tpu.memory_space<vmem>>, vector<1x256xf32>
    %9 = vector.broadcast %8 : vector<1x256xf32> to vector<128x256xf32>
    %10 = arith.addf %7, %9 : vector<128x256xf32>
    %11 = vector.extract_strided_slice %10 {offsets = [0, 0], sizes = [128, 128], strides = [1, 1]} : vector<128x256xf32> to vector<128x128xf32>
    %12 = arith.truncf %11 : vector<128x128xf32> to vector<128x128xbf16>
    %c0_9 = arith.constant 0 : index
    %c0_10 = arith.constant 0 : index
    %c0_11 = arith.constant 0 : index
    %13 = vector.load %arg8[%c0_9, %c0_10, %c0_11] : memref<1x128x128xbf16, #tpu.memory_space<vmem>>, vector<1x128x128xbf16>
    %14 = vector.shape_cast %13 : vector<1x128x128xbf16> to vector<128x128xbf16>
    %15 = vector.shape_cast %12 : vector<128x128xbf16> to vector<1x128x128xbf16>
    tpu.vector_store %arg8[%c0_9, %c0_10, %c0_11], %15 {strides = array<i32>} : memref<1x128x128xbf16, #tpu.memory_space<vmem>>, vector<1x128x128xbf16>,
    %16 = vector.extract_strided_slice %10 {offsets = [0, 128], sizes = [128, 128], strides = [1, 1]} : vector<128x256xf32> to vector<128x128xf32>
    %17 = arith.truncf %16 : vector<128x128xf32> to vector<128x128xbf16>
    %c0_12 = arith.constant 0 : index
    %c0_13 = arith.constant 0 : index
    %c0_14 = arith.constant 0 : index
    %18 = vector.load %arg9[%c0_12, %c0_13, %c0_14] : memref<1x128x128xbf16, #tpu.memory_space<vmem>>, vector<1x128x128xbf16>
    %19 = vector.shape_cast %18 : vector<1x128x128xbf16> to vector<128x128xbf16>
    %20 = vector.shape_cast %17 : vector<128x128xbf16> to vector<1x128x128xbf16>
    tpu.vector_store %arg9[%c0_12, %c0_13, %c0_14], %20 {strides = array<i32>} : memref<1x128x128xbf16, #tpu.memory_space<vmem>>, vector<1x128x128xbf16>,
    %c0_15 = arith.constant 0 : index
    %c0_16 = arith.constant 0 : index
    %21 = vector.load %arg6[%c0_15, %c0_16] : memref<128x128xbf16, #tpu.memory_space<vmem>>, vector<128x128xbf16>
    %cst_17 = arith.constant dense<0.000000e+00> : vector<128x128xf32>
    %22 = tpu.matmul %5, %21, %cst_17 {dimension_numbers = #tpu.dot_dimension_numbers<[1], [0], [0], [1], [0, 0, 1, 1], [], []>} : vector<128x128xbf16>, vector<128x128xbf16>, vector<128x128xf32> -> vector<128x128xf32>
    %c0_18 = arith.constant 0 : index
    %c0_19 = arith.constant 0 : index
    %23 = vector.load %arg7[%c0_18, %c0_19] : memref<1x128xf32, #tpu.memory_space<vmem>>, vector<1x128xf32>
    %24 = vector.broadcast %23 : vector<1x128xf32> to vector<128x128xf32>
    %25 = arith.addf %22, %24 : vector<128x128xf32>
    %26 = arith.truncf %25 : vector<128x128xf32> to vector<128x128xbf16>
    %c0_20 = arith.constant 0 : index
    %c0_21 = arith.constant 0 : index
    %c0_22 = arith.constant 0 : index
    %27 = vector.load %arg10[%c0_20, %c0_21, %c0_22] : memref<1x128x128xbf16, #tpu.memory_space<vmem>>, vector<1x128x128xbf16>
    %28 = vector.shape_cast %27 : vector<1x128x128xbf16> to vector<128x128xbf16>
    %29 = vector.shape_cast %26 : vector<128x128xbf16> to vector<1x128x128xbf16>
    tpu.vector_store %arg10[%c0_20, %c0_21, %c0_22], %29 {strides = array<i32>} : memref<1x128x128xbf16, #tpu.memory_space<vmem>>, vector<1x128x128xbf16>,
    return
  }
  func.func @transform_0(%arg0: i32, %arg1: i32) -> (i32, i32, i32) {
    %c0_i32 = arith.constant 0 : i32
    %c0_i32_0 = arith.constant 0 : i32
    return %arg0, %arg1, %c0_i32 : i32, i32, i32
  }
  func.func @transform_1(%arg0: i32, %arg1: i32) -> (i32, i32, i32) {
    %c0_i32 = arith.constant 0 : i32
    %c0_i32_0 = arith.constant 0 : i32
    return %arg0, %arg1, %c0_i32 : i32, i32, i32
  }
  func.func @transform_2(%arg0: i32, %arg1: i32) -> (i32, i32) {
    %c0_i32 = arith.constant 0 : i32
    %c0_i32_0 = arith.constant 0 : i32
    %c0_i32_1 = arith.constant 0 : i32
    return %c0_i32, %c0_i32_0 : i32, i32
  }
  func.func @transform_3(%arg0: i32, %arg1: i32) -> (i32, i32) {
    %c0_i32 = arith.constant 0 : i32
    %c0_i32_0 = arith.constant 0 : i32
    %c0_i32_1 = arith.constant 0 : i32
    return %c0_i32, %c0_i32_0 : i32, i32
  }
  func.func @transform_4(%arg0: i32, %arg1: i32) -> (i32, i32) {
    %c0_i32 = arith.constant 0 : i32
    %c0_i32_0 = arith.constant 0 : i32
    %c0_i32_1 = arith.constant 0 : i32
    return %c0_i32, %c0_i32_0 : i32, i32
  }
  func.func @transform_5(%arg0: i32, %arg1: i32) -> (i32, i32) {
    %c0_i32 = arith.constant 0 : i32
    %c0_i32_0 = arith.constant 0 : i32
    %c0_i32_1 = arith.constant 0 : i32
    return %c0_i32, %c0_i32_0 : i32, i32
  }
  func.func @transform_6(%arg0: i32, %arg1: i32) -> (i32, i32, i32) {
    %c0_i32 = arith.constant 0 : i32
    %c0_i32_0 = arith.constant 0 : i32
    return %arg0, %arg1, %c0_i32 : i32, i32, i32
  }
  func.func @transform_7(%arg0: i32, %arg1: i32) -> (i32, i32, i32) {
    %c0_i32 = arith.constant 0 : i32
    %c0_i32_0 = arith.constant 0 : i32
    return %arg0, %arg1, %c0_i32 : i32, i32, i32
  }
  func.func @transform_8(%arg0: i32, %arg1: i32) -> (i32, i32, i32) {
    %c0_i32 = arith.constant 0 : i32
    %c0_i32_0 = arith.constant 0 : i32
    return %arg0, %arg1, %c0_i32 : i32, i32, i32
  }
}

</mosaic_0001>

<llo_original>
// kernel: tpu_custom_call.1
$region0: #{tpu_custom_call.1}
  #allocation0 [shape = 'u32[]', space=smem, size = 0x4, offset = 0x4, fixed_abs, tag = 'smem constant byte address 0x4 - core index']
  #allocation1 [shape = 'u32[72,128]{1,0:T(1,128)}', space=vmem, size = 0x9000, scoped, tag = 'internal scratch']
  %s0 = inlined_call_operand.hbm [shape: f32[2,128,128], index: 0, kind: input, shape index: {}]
  %s1 = inlined_call_operand.hbm [shape: f32[2,128,128], index: 1, kind: input, shape index: {}]
  %s2 = inlined_call_operand.hbm [shape: bf16[128,256], index: 2, kind: input, shape index: {}]
  %s3 = inlined_call_operand.vmem [shape: f32[1,256], index: 3, kind: input, shape index: {}]
  %s4 = inlined_call_operand.hbm [shape: bf16[128,128], index: 4, kind: input, shape index: {}]
  %s5 = inlined_call_operand.vmem [shape: f32[1,128], index: 5, kind: input, shape index: {}]
  %s6 = inlined_call_operand.hbm [shape: bf16[2,128,128], index: 6, kind: output, shape index: {0}]
  %s7 = inlined_call_operand.hbm [shape: bf16[2,128,128], index: 7, kind: output, shape index: {1}]
  %s8 = inlined_call_operand.hbm [shape: bf16[2,128,128], index: 8, kind: output, shape index: {2}]
  %9 = xla_tuple %s6, %s7, %s8
  %s10 = sld [smem:[#allocation0]]
  $region89: #{tpu_custom_call.1} parent=0
    _
  %s12 = ssub.s32 1, %s10
  %s13 = scalar_select 0, %s12, %s10
  $region1: #{tpu_custom_call.1} parent=0
    #allocation2 [shape = 'u8[131072]{0}', space=vmem, size = 0x20000, scoped, tag = 'input window, operand 0']
    #allocation3 [shape = 's32[2]{0}', space=sflag, size = 0x8, scoped, tag = 'scoped memory for tpu_custom_call.1']
    #allocation4 [shape = 's32[2]{0}', space=sflag, size = 0x8, scoped, tag = 'scoped memory for tpu_custom_call.1']
    #allocation5 [shape = 'u8[131072]{0}', space=vmem, size = 0x20000, scoped, tag = 'input window, operand 1']
    #allocation6 [shape = 's32[2]{0}', space=sflag, size = 0x8, scoped, tag = 'scoped memory for tpu_custom_call.1']
    #allocation7 [shape = 'u8[65536]{0}', space=vmem, size = 0x10000, scoped, tag = 'input window, operand 2, single buffered']
    #allocation8 [shape = 'u8[32768]{0}', space=vmem, size = 0x8000, scoped, tag = 'input window, operand 4, single buffered']
    #allocation9 [shape = 's32[1]{0}', space=sflag, size = 0x4, scoped, tag = 'scoped memory for tpu_custom_call.1']
    #allocation10 [shape = 'u8[65536]{0}', space=vmem, size = 0x10000, scoped, tag = 'output window, operand 0']
    #allocation11 [shape = 'u8[65536]{0}', space=vmem, size = 0x10000, scoped, tag = 'output window, operand 1']
    #allocation12 [shape = 's32[2]{0}', space=sflag, size = 0x8, scoped, tag = 'scoped memory for tpu_custom_call.1']
    #allocation13 [shape = 'u8[65536]{0}', space=vmem, size = 0x10000, scoped, tag = 'output window, operand 2']
    %14 = vsyncpa [#allocation3], 0
    %s15 = scalar_lea.sflag [#allocation3], 1
    %16 = vsyncpa %s15, 0
    %17 = vsyncpa [#allocation6], 0
    %s18 = scalar_lea.sflag [#allocation6], 1
    %19 = vsyncpa %s18, 0
    %20 = vsyncpa [#allocation9], 0
    %21 = vsyncpa [#allocation4], 0
    %s22 = scalar_lea.sflag [#allocation4], 1
    %23 = vsyncpa %s22, 0
    %24 = vsyncpa [#allocation12], 0
    %s25 = scalar_lea.sflag [#allocation12], 1
    %26 = vsyncpa %s25, 0
    loop: start=0, step=1, limit=4
    $region2: #{tpu_custom_call.1} parent=1 // loop_pre_header
      _
    $region3: #{tpu_custom_call.1} parent=1 // loop_header
      %s28 = sphi 0, %s32
      %p29 = scmp.ge.s32.totalorder %s28, 4
      %s35 = sphi 0, %s47
      %s36 = sphi 0, %s43
      %s37 = sphi 0, %s35
      %s38 = sphi 0, %s36
      %s39 = sphi 0, %s37
      %s40 = sphi 0, %s38
      %s52 = sphi 0, %s54
      %s55 = sphi 0, %s52
      %s56 = sphi 0, %s55
      %s72 = sphi 0, %s56
      %s80 = sphi 0, %s82
      %s83 = sphi 0, %s80
      %s84 = sphi 0, %s83
      %s100 = sphi 0, %s84
      %s104 = sphi 0, %s104
      %s106 = sphi 0, %s104
      %s107 = sphi 0, %s106
      %s121 = sphi 0, %s107
      %s125 = sphi 0, %s125
      %s127 = sphi 0, %s125
      %s128 = sphi 0, %s127
      %s142 = sphi 0, %s128
      %s146 = sphi 0, %s146
      %s148 = sphi 0, %s146
      %s149 = sphi 0, %s148
      %s163 = sphi 0, %s149
      %s167 = sphi 0, %s167
      %s169 = sphi 0, %s167
      %s170 = sphi 0, %s169
      %s184 = sphi 0, %s170
      %s192 = sphi 0, %s194
      %s195 = sphi 0, %s192
      %s196 = sphi 0, %s195
      %s212 = sphi 0, %s196
      %s220 = sphi 0, %s222
      %s223 = sphi 0, %s220
      %s224 = sphi 0, %s223
      %s240 = sphi 0, %s224
      %s248 = sphi 0, %s250
      %s251 = sphi 0, %s248
      %s252 = sphi 0, %s251
      %s268 = sphi 0, %s252
    $region4: #{tpu_custom_call.1} parent=1 // loop_header_branch
      %31 = sbr.rel (%p29) target = $region8
    $region5: #{tpu_custom_call.1} parent=1 // loop_body
      %s33 = ssub.s32 %s28, 1
      %s34 = ssub.s32 %s28, 2
      %s41 = sadd.s32 1, %s36
      %p42 = scmp.ge.s32.totalorder %s41, 1
      %s43 = scalar_select %p42, 0, %s41
      %s44 = sadd.s32 1, %s35
      %s45 = scalar_select %p42, %s44, %s35
      %p46 = scmp.ge.s32.totalorder %s45, 2
      %s47 = scalar_select %p46, 0, %s45
      %s48 = ssub.s32 %s35, %s47
      %s49 = ssub.s32 %s36, %s43
      %s50 = sor.u32 %s48, %s49
      %p51 = scmp.eq.s32.totalorder %s50, 0
      %s53 = sadd.s32 %s52, 1
      %s54 = scalar_select %p51, %s52, %s53
      %p57 = pneg %p51
      %p58 = scmp.eq.s32.totalorder %s28, 1
      %p59 = por %p57, %p58
      %p60 = scmp.ne.s32.totalorder %s52, %s55
      %p61 = scmp.eq.s32.totalorder %s28, 0
      %p62 = por %p60, %p61
      %p63 = scmp.ne.s32.totalorder %s52, %s55
      %p64 = scmp.eq.s32.totalorder %s33, 1
      %p65 = por %p63, %p64
      %p66 = scmp.ne.s32.totalorder %s55, %s56
      %p67 = scmp.eq.s32.totalorder %s33, 0
      %p68 = por %p66, %p67
      %p69 = scmp.ne.s32.totalorder %s55, %s56
      %p70 = scmp.eq.s32.totalorder %s34, 1
      %p71 = por %p69, %p70
      %p73 = scmp.ne.s32.totalorder %s56, %s72
      %p74 = scmp.eq.s32.totalorder %s34, 0
      %p75 = por %p73, %p74
      %s76 = ssub.s32 %s35, %s47
      %s77 = ssub.s32 %s36, %s43
      %s78 = sor.u32 %s76, %s77
      %p79 = scmp.eq.s32.totalorder %s78, 0
      %s81 = sadd.s32 %s80, 1
      %s82 = scalar_select %p79, %s80, %s81
      %p85 = pneg %p79
      %p86 = scmp.eq.s32.totalorder %s28, 1
      %p87 = por %p85, %p86
      %p88 = scmp.ne.s32.totalorder %s80, %s83
      %p89 = scmp.eq.s32.totalorder %s28, 0
      %p90 = por %p88, %p89
      %p91 = scmp.ne.s32.totalorder %s80, %s83
      %p92 = scmp.eq.s32.totalorder %s33, 1
      %p93 = por %p91, %p92
      %p94 = scmp.ne.s32.totalorder %s83, %s84
      %p95 = scmp.eq.s32.totalorder %s33, 0
      %p96 = por %p94, %p95
      %p97 = scmp.ne.s32.totalorder %s83, %s84
      %p98 = scmp.eq.s32.totalorder %s34, 1
      %p99 = por %p97, %p98
      %p101 = scmp.ne.s32.totalorder %s84, %s100
      %p102 = scmp.eq.s32.totalorder %s34, 0
      %p103 = por %p101, %p102
      %s105 = sadd.s32 %s104, 1
      %p108 = scmp.eq.s32.totalorder %s28, 1
      %p109 = scmp.ne.s32.totalorder %s104, %s106
      %p110 = scmp.eq.s32.totalorder %s28, 0
      %p111 = por %p109, %p110
      %p112 = scmp.ne.s32.totalorder %s104, %s106
      %p113 = scmp.eq.s32.totalorder %s33, 1
      %p114 = por %p112, %p113
      %p115 = scmp.ne.s32.totalorder %s106, %s107
      %p116 = scmp.eq.s32.totalorder %s33, 0
      %p117 = por %p115, %p116
      %p118 = scmp.ne.s32.totalorder %s106, %s107
      %p119 = scmp.eq.s32.totalorder %s34, 1
      %p120 = por %p118, %p119
      %p122 = scmp.ne.s32.totalorder %s107, %s121
      %p123 = scmp.eq.s32.totalorder %s34, 0
      %p124 = por %p122, %p123
      %s126 = sadd.s32 %s125, 1
      %p129 = scmp.eq.s32.totalorder %s28, 1
      %p130 = scmp.ne.s32.totalorder %s125, %s127
      %p131 = scmp.eq.s32.totalorder %s28, 0
      %p132 = por %p130, %p131
      %p133 = scmp.ne.s32.totalorder %s125, %s127
      %p134 = scmp.eq.s32.totalorder %s33, 1
      %p135 = por %p133, %p134
      %p136 = scmp.ne.s32.totalorder %s127, %s128
      %p137 = scmp.eq.s32.totalorder %s33, 0
      %p138 = por %p136, %p137
      %p139 = scmp.ne.s32.totalorder %s127, %s128
      %p140 = scmp.eq.s32.totalorder %s34, 1
      %p141 = por %p139, %p140
      %p143 = scmp.ne.s32.totalorder %s128, %s142
      %p144 = scmp.eq.s32.totalorder %s34, 0
      %p145 = por %p143, %p144
      %s147 = sadd.s32 %s146, 1
      %p150 = scmp.eq.s32.totalorder %s28, 1
      %p151 = scmp.ne.s32.totalorder %s146, %s148
      %p152 = scmp.eq.s32.totalorder %s28, 0
      %p153 = por %p151, %p152
      %p154 = scmp.ne.s32.totalorder %s146, %s148
      %p155 = scmp.eq.s32.totalorder %s33, 1
      %p156 = por %p154, %p155
      %p157 = scmp.ne.s32.totalorder %s148, %s149
      %p158 = scmp.eq.s32.totalorder %s33, 0
      %p159 = por %p157, %p158
      %p160 = scmp.ne.s32.totalorder %s148, %s149
      %p161 = scmp.eq.s32.totalorder %s34, 1
      %p162 = por %p160, %p161
      %p164 = scmp.ne.s32.totalorder %s149, %s163
      %p165 = scmp.eq.s32.totalorder %s34, 0
      %p166 = por %p164, %p165
      %s168 = sadd.s32 %s167, 1
      %p171 = scmp.eq.s32.totalorder %s28, 1
      %p172 = scmp.ne.s32.totalorder %s167, %s169
      %p173 = scmp.eq.s32.totalorder %s28, 0
      %p174 = por %p172, %p173
      %p175 = scmp.ne.s32.totalorder %s167, %s169
      %p176 = scmp.eq.s32.totalorder %s33, 1
      %p177 = por %p175, %p176
      %p178 = scmp.ne.s32.totalorder %s169, %s170
      %p179 = scmp.eq.s32.totalorder %s33, 0
      %p180 = por %p178, %p179
      %p181 = scmp.ne.s32.totalorder %s169, %s170
      %p182 = scmp.eq.s32.totalorder %s34, 1
      %p183 = por %p181, %p182
      %p185 = scmp.ne.s32.totalorder %s170, %s184
      %p186 = scmp.eq.s32.totalorder %s34, 0
      %p187 = por %p185, %p186
      %s188 = ssub.s32 %s35, %s47
      %s189 = ssub.s32 %s36, %s43
      %s190 = sor.u32 %s188, %s189
      %p191 = scmp.eq.s32.totalorder %s190, 0
      %s193 = sadd.s32 %s192, 1
      %s194 = scalar_select %p191, %s192, %s193
      %p197 = pneg %p191
      %p198 = scmp.eq.s32.totalorder %s28, 1
      %p199 = por %p197, %p198
      %p200 = scmp.ne.s32.totalorder %s192, %s195
      %p201 = scmp.eq.s32.totalorder %s28, 0
      %p202 = por %p200, %p201
      %p203 = scmp.ne.s32.totalorder %s192, %s195
      %p204 = scmp.eq.s32.totalorder %s33, 1
      %p205 = por %p203, %p204
      %p206 = scmp.ne.s32.totalorder %s195, %s196
      %p207 = scmp.eq.s32.totalorder %s33, 0
      %p208 = por %p206, %p207
      %p209 = scmp.ne.s32.totalorder %s195, %s196
      %p210 = scmp.eq.s32.totalorder %s34, 1
      %p211 = por %p209, %p210
      %p213 = scmp.ne.s32.totalorder %s196, %s212
      %p214 = scmp.eq.s32.totalorder %s34, 0
      %p215 = por %p213, %p214
      %s216 = ssub.s32 %s35, %s47
      %s217 = ssub.s32 %s36, %s43
      %s218 = sor.u32 %s216, %s217
      %p219 = scmp.eq.s32.totalorder %s218, 0
      %s221 = sadd.s32 %s220, 1
      %s222 = scalar_select %p219, %s220, %s221
      %p225 = pneg %p219
      %p226 = scmp.eq.s32.totalorder %s28, 1
      %p227 = por %p225, %p226
      %p228 = scmp.ne.s32.totalorder %s220, %s223
      %p229 = scmp.eq.s32.totalorder %s28, 0
      %p230 = por %p228, %p229
      %p231 = scmp.ne.s32.totalorder %s220, %s223
      %p232 = scmp.eq.s32.totalorder %s33, 1
      %p233 = por %p231, %p232
      %p234 = scmp.ne.s32.totalorder %s223, %s224
      %p235 = scmp.eq.s32.totalorder %s33, 0
      %p236 = por %p234, %p235
      %p237 = scmp.ne.s32.totalorder %s223, %s224
      %p238 = scmp.eq.s32.totalorder %s34, 1
      %p239 = por %p237, %p238
      %p241 = scmp.ne.s32.totalorder %s224, %s240
      %p242 = scmp.eq.s32.totalorder %s34, 0
      %p243 = por %p241, %p242
      %s244 = ssub.s32 %s35, %s47
      %s245 = ssub.s32 %s36, %s43
      %s246 = sor.u32 %s244, %s245
      %p247 = scmp.eq.s32.totalorder %s246, 0
      %s249 = sadd.s32 %s248, 1
      %s250 = scalar_select %p247, %s248, %s249
      %p253 = pneg %p247
      %p254 = scmp.eq.s32.totalorder %s28, 1
      %p255 = por %p253, %p254
      %p256 = scmp.ne.s32.totalorder %s248, %s251
      %p257 = scmp.eq.s32.totalorder %s28, 0
      %p258 = por %p256, %p257
      %p259 = scmp.ne.s32.totalorder %s248, %s251
      %p260 = scmp.eq.s32.totalorder %s33, 1
      %p261 = por %p259, %p260
      %p262 = scmp.ne.s32.totalorder %s251, %s252
      %p263 = scmp.eq.s32.totalorder %s33, 0
      %p264 = por %p262, %p263
      %p265 = scmp.ne.s32.totalorder %s251, %s252
      %p266 = scmp.eq.s32.totalorder %s34, 1
      %p267 = por %p265, %p266
      %p269 = scmp.ne.s32.totalorder %s252, %s268
      %p270 = scmp.eq.s32.totalorder %s34, 0
      %p271 = por %p269, %p270
      %p272 = scmp.le.s32.totalorder 1, %s28
      %p273 = scmp.lt.s32.totalorder %s28, 3
      %p274 = pnand %p272, %p273
      %p275 = pneg %p274
      // Predicated region
      $region9: #{tpu_custom_call.1} parent=5 // pred_check
        _
      $region10: #{tpu_custom_call.1} parent=5 // pred_check_branch
        %277 = sbr.rel (%p274) target = $region12
      $region11: #{tpu_custom_call.1} parent=5 // pred_region
        %s278 = ssub.s32 %s28, 1
        // Predicated region
        $region13: #{tpu_custom_call.1} parent=11 // pred_check
          %p279 = pneg %p117
        $region14: #{tpu_custom_call.1} parent=11 // pred_check_branch
          %281 = sbr.rel (%p279) target = $region16
        $region15: #{tpu_custom_call.1} parent=11 // pred_region
          %283 = vsyncadd [#allocation6], 0
          %s284 = sshll.u32 %s2, 4
          %s285 = int_to_ptr.hbm [resolvable:$true] %s284
          %s286 = sshll.u32 [#allocation7], 4
          %s287 = int_to_ptr.vmem [resolvable:$true] %s286
          %292 = dma.hbm_to_vmem [thread:$0]  %s285, 2048, %s287, [#allocation6], 128, 128, 8
        $region16: #{tpu_custom_call.1} parent=11 // pred_fallthru
          _
        // Predicated region
        $region17: #{tpu_custom_call.1} parent=11 // pred_check
          %p293 = pneg %p138
        $region18: #{tpu_custom_call.1} parent=11 // pred_check_branch
          %295 = sbr.rel (%p293) target = $region20
        $region19: #{tpu_custom_call.1} parent=11 // pred_region
          _
        $region20: #{tpu_custom_call.1} parent=11 // pred_fallthru
          _
        // Predicated region
        $region21: #{tpu_custom_call.1} parent=11 // pred_check
          %p296 = pneg %p159
        $region22: #{tpu_custom_call.1} parent=11 // pred_check_branch
          %298 = sbr.rel (%p296) target = $region24
        $region23: #{tpu_custom_call.1} parent=11 // pred_region
          %300 = vsyncadd [#allocation9], 0
          %s301 = sshll.u32 %s4, 4
          %s302 = int_to_ptr.hbm [resolvable:$true] %s301
          %s303 = sshll.u32 [#allocation8], 4
          %s304 = int_to_ptr.vmem [resolvable:$true] %s303
          %309 = dma.hbm_to_vmem [thread:$0]  %s302, 1024, %s304, [#allocation9], 64, 64, 4
        $region24: #{tpu_custom_call.1} parent=11 // pred_fallthru
          _
        // Predicated region
        $region25: #{tpu_custom_call.1} parent=11 // pred_check
          %p310 = pneg %p180
        $region26: #{tpu_custom_call.1} parent=11 // pred_check_branch
          %312 = sbr.rel (%p310) target = $region28
        $region27: #{tpu_custom_call.1} parent=11 // pred_region
          _
        $region28: #{tpu_custom_call.1} parent=11 // pred_fallthru
          _
      $region12: #{tpu_custom_call.1} parent=5 // pred_fallthru
        _
      %p313 = scmp.lt.s32.totalorder %s28, 2
      // Predicated region
      $region29: #{tpu_custom_call.1} parent=5 // pred_check
        %p314 = pneg %p313
      $region30: #{tpu_custom_call.1} parent=5 // pred_check_branch
        %316 = sbr.rel (%p314) target = $region32
      $region31: #{tpu_custom_call.1} parent=5 // pred_region
        // Predicated region
        $region33: #{tpu_custom_call.1} parent=31 // pred_check
          %p317 = pneg %p62
        $region34: #{tpu_custom_call.1} parent=31 // pred_check_branch
          %319 = sbr.rel (%p317) target = $region36
        $region35: #{tpu_custom_call.1} parent=31 // pred_region
          %s320 = sand.u32 %s52, 1
          %s321 = scalar_lea.sflag [#allocation3], %s320
          %s322 = sand.u32 %s52, 1
          %s323 = smul.addr %s322, 128
          %s324 = scalar_lea.vmem [#allocation2], %s323
          %s325 = smul.u32 16, %s36
          %327 = vsyncadd %s321, 0
          %s328 = smul.addr %s35, 16
          %s329 = sadd.s32 %s325, %s328
          %s330 = smul.addr %s329, 8
          %s331 = scalar_lea.hbm %s0, %s330
          %s332 = sshll.u32 %s331, 4
          %s333 = int_to_ptr.hbm [resolvable:$true] %s332
          %s334 = sshll.u32 %s324, 4
          %s335 = int_to_ptr.vmem [resolvable:$true] %s334
          %340 = dma.hbm_to_vmem [thread:$0]  %s333, 2048, %s335, %s321, 128, 128, 8
        $region36: #{tpu_custom_call.1} parent=31 // pred_fallthru
          _
        // Predicated region
        $region37: #{tpu_custom_call.1} parent=31 // pred_check
          %p341 = pneg %p90
        $region38: #{tpu_custom_call.1} parent=31 // pred_check_branch
          %343 = sbr.rel (%p341) target = $region40
        $region39: #{tpu_custom_call.1} parent=31 // pred_region
          %s344 = sand.u32 %s28, 1
          %s345 = scalar_lea.sflag [#allocation6], %s344
          %s346 = sand.u32 %s80, 1
          %s347 = smul.addr %s346, 128
          %s348 = scalar_lea.vmem [#allocation5], %s347
          %s349 = smul.u32 16, %s36
          %351 = vsyncadd %s345, 0
          %s352 = smul.addr %s35, 16
          %s353 = sadd.s32 %s349, %s352
          %s354 = smul.addr %s353, 8
          %s355 = scalar_lea.hbm %s1, %s354
          %s356 = sshll.u32 %s355, 4
          %s357 = int_to_ptr.hbm [resolvable:$true] %s356
          %s358 = sshll.u32 %s348, 4
          %s359 = int_to_ptr.vmem [resolvable:$true] %s358
          %364 = dma.hbm_to_vmem [thread:$0]  %s357, 2048, %s359, %s345, 128, 128, 8
        $region40: #{tpu_custom_call.1} parent=31 // pred_fallthru
          _
      $region32: #{tpu_custom_call.1} parent=5 // pred_fallthru
        _
      %p365 = scmp.le.s32.totalorder 1, %s28
      %p366 = scmp.lt.s32.totalorder %s28, 3
      %p367 = pnand %p365, %p366
      %p368 = pneg %p367
      // Predicated region
      $region41: #{tpu_custom_call.1} parent=5 // pred_check
        _
      $region42: #{tpu_custom_call.1} parent=5 // pred_check_branch
        %370 = sbr.rel (%p367) target = $region44
      $region43: #{tpu_custom_call.1} parent=5 // pred_region
        %s371 = ssub.s32 %s28, 1
        %s372 = sand.u32 %s55, 1
        %s373 = scalar_lea.sflag [#allocation3], %s372
        %s374 = sand.u32 %s55, 1
        %s375 = smul.addr %s374, 128
        %s376 = scalar_lea.vmem [#allocation2], %s375
        // Predicated region
        $region45: #{tpu_custom_call.1} parent=43 // pred_check
          %p377 = pneg %p68
        $region46: #{tpu_custom_call.1} parent=43 // pred_check_branch
          %379 = sbr.rel (%p377) target = $region48
        $region47: #{tpu_custom_call.1} parent=43 // pred_region
          %381 = dma.done %s373, 2048
        $region48: #{tpu_custom_call.1} parent=43 // pred_fallthru
          _
        %s382 = sand.u32 %s33, 1
        %s383 = scalar_lea.sflag [#allocation6], %s382
        %s384 = sand.u32 %s83, 1
        %s385 = smul.addr %s384, 128
        %s386 = scalar_lea.vmem [#allocation5], %s385
        // Predicated region
        $region49: #{tpu_custom_call.1} parent=43 // pred_check
          %p387 = pneg %p96
        $region50: #{tpu_custom_call.1} parent=43 // pred_check_branch
          %389 = sbr.rel (%p387) target = $region52
        $region51: #{tpu_custom_call.1} parent=43 // pred_region
          %391 = dma.done %s383, 2048
        $region52: #{tpu_custom_call.1} parent=43 // pred_fallthru
          _
        // Predicated region
        $region53: #{tpu_custom_call.1} parent=43 // pred_check
          %p392 = pneg %p117
        $region54: #{tpu_custom_call.1} parent=43 // pred_check_branch
          %394 = sbr.rel (%p392) target = $region56
        $region55: #{tpu_custom_call.1} parent=43 // pred_region
          %396 = dma.done [#allocation6], 2048
        $region56: #{tpu_custom_call.1} parent=43 // pred_fallthru
          _
        // Predicated region
        $region57: #{tpu_custom_call.1} parent=43 // pred_check
          %p397 = pneg %p159
        $region58: #{tpu_custom_call.1} parent=43 // pred_check_branch
          %399 = sbr.rel (%p397) target = $region60
        $region59: #{tpu_custom_call.1} parent=43 // pred_region
          %401 = dma.done [#allocation9], 1024
        $region60: #{tpu_custom_call.1} parent=43 // pred_fallthru
          _
        %s402 = sand.u32 %s55, 1
        %s403 = scalar_lea.sflag [#allocation3], %s402
        %s404 = sand.u32 %s55, 1
        %s405 = smul.addr %s404, 128
        %s406 = scalar_lea.vmem [#allocation2], %s405
        %p407 = pneg %p68
        %p408 = pneg %p65
        %s409 = sand.u32 %s33, 1
        %s410 = scalar_lea.sflag [#allocation6], %s409
        %s411 = sand.u32 %s83, 1
        %s412 = smul.addr %s411, 128
        %s413 = scalar_lea.vmem [#allocation5], %s412
        %p414 = pneg %p96
        %p415 = pneg %p93
        %p416 = pneg %p117
        %p417 = pneg %p114
        %p418 = pneg %p138
        %p419 = pneg %p135
        %p420 = pneg %p159
        %p421 = pneg %p156
        %p422 = pneg %p180
        %p423 = pneg %p177
        %p424 = pneg %p208
        %p425 = pneg %p205
        %s426 = sand.u32 %s195, 1
        %s427 = scalar_lea.sflag [#allocation4], %s426
        %s428 = sand.u32 %s195, 1
        %s429 = smul.addr %s428, 64
        %s430 = scalar_lea.vmem [#allocation10], %s429
        %p431 = pneg %p236
        %p432 = pneg %p233
        %s433 = sand.u32 %s33, 1
        %s434 = scalar_lea.sflag [#allocation12], %s433
        %s435 = sand.u32 %s223, 1
        %s436 = smul.addr %s435, 64
        %s437 = scalar_lea.vmem [#allocation11], %s436
        %p438 = pneg %p264
        %p439 = pneg %p261
        %s440 = sand.u32 %s33, 1
        %s441 = scalar_lea.sflag [#allocation12], %s440
        %s442 = sand.u32 %s251, 1
        %s443 = smul.addr %s442, 64
        %s444 = scalar_lea.vmem [#allocation13], %s443
        %s445 = smul.u32 16, %s38
        %s446 = smul.u32 16, %s38
        %s447 = smul.u32 16, %s38
        %s448 = smul.u32 16, %s38
        %s449 = smul.u32 16, %s38
        %v450 = vld [vmem:[%s376] sm:$0xff]
        %v451 = vld [vmem:[%s376 + $0x8] sm:$0xff]
        %v452 = vld [vmem:[%s376 + $0x10] sm:$0xff]
        %v453 = vld [vmem:[%s376 + $0x18] sm:$0xff]
        %v454 = vld [vmem:[%s376 + $0x20] sm:$0xff]
        %v455 = vld [vmem:[%s376 + $0x28] sm:$0xff]
        %v456 = vld [vmem:[%s376 + $0x30] sm:$0xff]
        %v457 = vld [vmem:[%s376 + $0x38] sm:$0xff]
        %v458 = vld [vmem:[%s376 + $0x40] sm:$0xff]
        %v459 = vld [vmem:[%s376 + $0x48] sm:$0xff]
        %v460 = vld [vmem:[%s376 + $0x50] sm:$0xff]
        %v461 = vld [vmem:[%s376 + $0x58] sm:$0xff]
        %v462 = vld [vmem:[%s376 + $0x60] sm:$0xff]
        %v463 = vld [vmem:[%s376 + $0x68] sm:$0xff]
        %v464 = vld [vmem:[%s376 + $0x70] sm:$0xff]
        %v465 = vld [vmem:[%s376 + $0x78] sm:$0xff]
        %v466 = vpack.c.bf16 %v451, %v450
        %v467 = vpack.c.bf16 %v453, %v452
        %v468 = vpack.c.bf16 %v455, %v454
        %v469 = vpack.c.bf16 %v457, %v456
        %v470 = vpack.c.bf16 %v459, %v458
        %v471 = vpack.c.bf16 %v461, %v460
        %v472 = vpack.c.bf16 %v463, %v462
        %v473 = vpack.c.bf16 %v465, %v464
        %v474 = vld [vmem:[%s386] sm:$0xff]
        %v475 = vld [vmem:[%s386 + $0x8] sm:$0xff]
        %v476 = vld [vmem:[%s386 + $0x10] sm:$0xff]
        %v477 = vld [vmem:[%s386 + $0x18] sm:$0xff]
        %v478 = vld [vmem:[%s386 + $0x20] sm:$0xff]
        %v479 = vld [vmem:[%s386 + $0x28] sm:$0xff]
        %v480 = vld [vmem:[%s386 + $0x30] sm:$0xff]
        %v481 = vld [vmem:[%s386 + $0x38] sm:$0xff]
        %v482 = vld [vmem:[%s386 + $0x40] sm:$0xff]
        %v483 = vld [vmem:[%s386 + $0x48] sm:$0xff]
        %v484 = vld [vmem:[%s386 + $0x50] sm:$0xff]
        %v485 = vld [vmem:[%s386 + $0x58] sm:$0xff]
        %v486 = vld [vmem:[%s386 + $0x60] sm:$0xff]
        %v487 = vld [vmem:[%s386 + $0x68] sm:$0xff]
        %v488 = vld [vmem:[%s386 + $0x70] sm:$0xff]
        %v489 = vld [vmem:[%s386 + $0x78] sm:$0xff]
        %v490 = vpack.c.bf16 %v475, %v474
        %v491 = vpack.c.bf16 %v477, %v476
        %v492 = vpack.c.bf16 %v479, %v478
        %v493 = vpack.c.bf16 %v481, %v480
        %v494 = vpack.c.bf16 %v483, %v482
        %v495 = vpack.c.bf16 %v485, %v484
        %v496 = vpack.c.bf16 %v487, %v486
        %v497 = vpack.c.bf16 %v489, %v488
        %v498 = vld [vmem:[#allocation7] sm:$0xff]
        %v499 = vld [vmem:[#allocation7 + $0x8] sm:$0xff]
        %v500 = vld [vmem:[#allocation7 + $0x10] sm:$0xff]
        %v501 = vld [vmem:[#allocation7 + $0x18] sm:$0xff]
        %v502 = vld [vmem:[#allocation7 + $0x20] sm:$0xff]
        %v503 = vld [vmem:[#allocation7 + $0x28] sm:$0xff]
        %v504 = vld [vmem:[#allocation7 + $0x30] sm:$0xff]
        %v505 = vld [vmem:[#allocation7 + $0x38] sm:$0xff]
        %v506 = vld [vmem:[#allocation7 + $0x40] sm:$0xff]
        %v507 = vld [vmem:[#allocation7 + $0x48] sm:$0xff]
        %v508 = vld [vmem:[#allocation7 + $0x50] sm:$0xff]
        %v509 = vld [vmem:[#allocation7 + $0x58] sm:$0xff]
        %v510 = vld [vmem:[#allocation7 + $0x60] sm:$0xff]
        %v511 = vld [vmem:[#allocation7 + $0x68] sm:$0xff]
        %v512 = vld [vmem:[#allocation7 + $0x70] sm:$0xff]
        %v513 = vld [vmem:[#allocation7 + $0x78] sm:$0xff]
        %v514 = vld [vmem:[%s3] sm:$0x3]
        %v516 = vperm.slane %v514, 0
        %v517 = vperm.slane %v514, 1
        %v536 = vunpack.c.l.b16 %v498
        %v537 = vunpack.c.h.b16 %v498
        %v538 = vunpack.c.l.b16 %v499
        %v539 = vunpack.c.h.b16 %v499
        %v540 = vunpack.c.l.b16 %v500
        %v541 = vunpack.c.h.b16 %v500
        %v542 = vunpack.c.l.b16 %v501
        %v543 = vunpack.c.h.b16 %v501
        %v544 = vunpack.c.l.b16 %v502
        %v545 = vunpack.c.h.b16 %v502
        %v546 = vunpack.c.l.b16 %v503
        %v547 = vunpack.c.h.b16 %v503
        %v548 = vunpack.c.l.b16 %v504
        %v549 = vunpack.c.h.b16 %v504
        %v550 = vunpack.c.l.b16 %v505
        %v551 = vunpack.c.h.b16 %v505
        %v552 = vunpack.c.l.b16 %v506
        %v553 = vunpack.c.h.b16 %v506
        %v554 = vunpack.c.l.b16 %v507
        %v555 = vunpack.c.h.b16 %v507
        %v556 = vunpack.c.l.b16 %v508
        %v557 = vunpack.c.h.b16 %v508
        %v558 = vunpack.c.l.b16 %v509
        %v559 = vunpack.c.h.b16 %v509
        %v560 = vunpack.c.l.b16 %v510
        %v561 = vunpack.c.h.b16 %v510
        %v562 = vunpack.c.l.b16 %v511
        %v563 = vunpack.c.h.b16 %v511
        %v564 = vunpack.c.l.b16 %v512
        %v565 = vunpack.c.h.b16 %v512
        %v566 = vunpack.c.l.b16 %v513
        %v567 = vunpack.c.h.b16 %v513
        %v568 = vpack.c.b16 %v538, %v536
        %v569 = vpack.c.b16 %v539, %v537
        %v570 = vpack.c.b16 %v542, %v540
        %v571 = vpack.c.b16 %v543, %v541
        %v572 = vpack.c.b16 %v546, %v544
        %v573 = vpack.c.b16 %v547, %v545
        %v574 = vpack.c.b16 %v550, %v548
        %v575 = vpack.c.b16 %v551, %v549
        %v576 = vpack.c.b16 %v554, %v552
        %v577 = vpack.c.b16 %v555, %v553
        %v578 = vpack.c.b16 %v558, %v556
        %v579 = vpack.c.b16 %v559, %v557
        %v580 = vpack.c.b16 %v562, %v560
        %v581 = vpack.c.b16 %v563, %v561
        %v582 = vpack.c.b16 %v566, %v564
        %v583 = vpack.c.b16 %v567, %v565
        %600 = vmatpush.bf16.msra.mxu0 %v582
        %601 = vmatpush.bf16.msra.mxu0 %v580
        %602 = vmatpush.bf16.msra.mxu0 %v578
        %603 = vmatpush.bf16.msra.mxu0 %v576
        %604 = vmatpush.bf16.msra.mxu0 %v574
        %605 = vmatpush.bf16.msra.mxu0 %v572
        %606 = vmatpush.bf16.msra.mxu0 %v570
        %607 = vmatpush.bf16.msra.mxu0 %v568
        %608 = vmatmul.bf16.gmra.mxu0 %v466
        %v609 = vpop.f32.mrf.mxu0
        %v610 = vadd.f32 %v516, %v609
        %v611 = vpop.f32.mrf.mxu0
        %v612 = vadd.f32 %v516, %v611
        %613 = vmatmul.bf16.gmra.mxu0 %v467
        %v614 = vpop.f32.mrf.mxu0
        %v615 = vadd.f32 %v516, %v614
        %v616 = vpop.f32.mrf.mxu0
        %v617 = vadd.f32 %v516, %v616
        %618 = vmatmul.bf16.gmra.mxu0 %v468
        %v619 = vpop.f32.mrf.mxu0
        %v620 = vadd.f32 %v516, %v619
        %v621 = vpop.f32.mrf.mxu0
        %v622 = vadd.f32 %v516, %v621
        %623 = vmatmul.bf16.gmra.mxu0 %v469
        %v624 = vpop.f32.mrf.mxu0
        %v625 = vadd.f32 %v516, %v624
        %v626 = vpop.f32.mrf.mxu0
        %v627 = vadd.f32 %v516, %v626
        %628 = vmatmul.bf16.gmra.mxu0 %v470
        %v629 = vpop.f32.mrf.mxu0
        %v630 = vadd.f32 %v516, %v629
        %v631 = vpop.f32.mrf.mxu0
        %v632 = vadd.f32 %v516, %v631
        %633 = vmatmul.bf16.gmra.mxu0 %v471
        %v634 = vpop.f32.mrf.mxu0
        %v635 = vadd.f32 %v516, %v634
        %v636 = vpop.f32.mrf.mxu0
        %v637 = vadd.f32 %v516, %v636
        %638 = vmatmul.bf16.gmra.mxu0 %v472
        %v639 = vpop.f32.mrf.mxu0
        %v640 = vadd.f32 %v516, %v639
        %v641 = vpop.f32.mrf.mxu0
        %v642 = vadd.f32 %v516, %v641
        %643 = vmatmul.bf16.gmra.mxu0 %v473
        %v644 = vpop.f32.mrf.mxu0
        %v645 = vadd.f32 %v516, %v644
        %v646 = vpop.f32.mrf.mxu0
        %v647 = vadd.f32 %v516, %v646
        %648 = vdwg.mxu0
        %649 = vmatpush.bf16.msra.mxu0 %v583
        %650 = vmatpush.bf16.msra.mxu0 %v581
        %651 = vmatpush.bf16.msra.mxu0 %v579
        %652 = vmatpush.bf16.msra.mxu0 %v577
        %653 = vmatpush.bf16.msra.mxu0 %v575
        %654 = vmatpush.bf16.msra.mxu0 %v573
        %655 = vmatpush.bf16.msra.mxu0 %v571
        %656 = vmatpush.bf16.msra.mxu0 %v569
        %657 = vmatmul.bf16.gmra.mxu0 %v466
        %v658 = vpop.f32.mrf.mxu0
        %v659 = vadd.f32 %v517, %v658
        %v660 = vpop.f32.mrf.mxu0
        %v661 = vadd.f32 %v517, %v660
        %662 = vmatmul.bf16.gmra.mxu0 %v467
        %v663 = vpop.f32.mrf.mxu0
        %v664 = vadd.f32 %v517, %v663
        %v665 = vpop.f32.mrf.mxu0
        %v666 = vadd.f32 %v517, %v665
        %667 = vmatmul.bf16.gmra.mxu0 %v468
        %v668 = vpop.f32.mrf.mxu0
        %v669 = vadd.f32 %v517, %v668
        %v670 = vpop.f32.mrf.mxu0
        %v671 = vadd.f32 %v517, %v670
        %672 = vmatmul.bf16.gmra.mxu0 %v469
        %v673 = vpop.f32.mrf.mxu0
        %v674 = vadd.f32 %v517, %v673
        %v675 = vpop.f32.mrf.mxu0
        %v676 = vadd.f32 %v517, %v675
        %677 = vmatmul.bf16.gmra.mxu0 %v470
        %v678 = vpop.f32.mrf.mxu0
        %v679 = vadd.f32 %v517, %v678
        %v680 = vpop.f32.mrf.mxu0
        %v681 = vadd.f32 %v517, %v680
        %682 = vmatmul.bf16.gmra.mxu0 %v471
        %v683 = vpop.f32.mrf.mxu0
        %v684 = vadd.f32 %v517, %v683
        %v685 = vpop.f32.mrf.mxu0
        %v686 = vadd.f32 %v517, %v685
        %687 = vmatmul.bf16.gmra.mxu0 %v472
        %v688 = vpop.f32.mrf.mxu0
        %v689 = vadd.f32 %v517, %v688
        %v690 = vpop.f32.mrf.mxu0
        %v691 = vadd.f32 %v517, %v690
        %692 = vmatmul.bf16.gmra.mxu0 %v473
        %v693 = vpop.f32.mrf.mxu0
        %v694 = vadd.f32 %v517, %v693
        %v695 = vpop.f32.mrf.mxu0
        %v696 = vadd.f32 %v517, %v695
        %697 = vdwg.mxu0
        %v698 = vpack.c.bf16 %v610, %v610
        %v699 = vpack.c.bf16 %v612, %v612
        %v700 = vpack.c.bf16 %v615, %v615
        %v701 = vpack.c.bf16 %v617, %v617
        %v702 = vpack.c.bf16 %v620, %v620
        %v703 = vpack.c.bf16 %v622, %v622
        %v704 = vpack.c.bf16 %v625, %v625
        %v705 = vpack.c.bf16 %v627, %v627
        %v706 = vpack.c.bf16 %v630, %v630
        %v707 = vpack.c.bf16 %v632, %v632
        %v708 = vpack.c.bf16 %v635, %v635
        %v709 = vpack.c.bf16 %v637, %v637
        %v710 = vpack.c.bf16 %v640, %v640
        %v711 = vpack.c.bf16 %v642, %v642
        %v712 = vpack.c.bf16 %v645, %v645
        %v713 = vpack.c.bf16 %v647, %v647
        %714 = vst [vmem:[%s430] sm:$0xf] %v698
        %715 = vst [vmem:[%s430 + $0x4] sm:$0xf] %v699
        %716 = vst [vmem:[%s430 + $0x8] sm:$0xf] %v700
        %717 = vst [vmem:[%s430 + $0xc] sm:$0xf] %v701
        %718 = vst [vmem:[%s430 + $0x10] sm:$0xf] %v702
        %719 = vst [vmem:[%s430 + $0x14] sm:$0xf] %v703
        %720 = vst [vmem:[%s430 + $0x18] sm:$0xf] %v704
        %721 = vst [vmem:[%s430 + $0x1c] sm:$0xf] %v705
        %722 = vst [vmem:[%s430 + $0x20] sm:$0xf] %v706
        %723 = vst [vmem:[%s430 + $0x24] sm:$0xf] %v707
        %724 = vst [vmem:[%s430 + $0x28] sm:$0xf] %v708
        %725 = vst [vmem:[%s430 + $0x2c] sm:$0xf] %v709
        %726 = vst [vmem:[%s430 + $0x30] sm:$0xf] %v710
        %727 = vst [vmem:[%s430 + $0x34] sm:$0xf] %v711
        %728 = vst [vmem:[%s430 + $0x38] sm:$0xf] %v712
        %729 = vst [vmem:[%s430 + $0x3c] sm:$0xf] %v713
        %v730 = vpack.c.bf16 %v659, %v659
        %v731 = vpack.c.bf16 %v661, %v661
        %v732 = vpack.c.bf16 %v664, %v664
        %v733 = vpack.c.bf16 %v666, %v666
        %v734 = vpack.c.bf16 %v669, %v669
        %v735 = vpack.c.bf16 %v671, %v671
        %v736 = vpack.c.bf16 %v674, %v674
        %v737 = vpack.c.bf16 %v676, %v676
        %v738 = vpack.c.bf16 %v679, %v679
        %v739 = vpack.c.bf16 %v681, %v681
        %v740 = vpack.c.bf16 %v684, %v684
        %v741 = vpack.c.bf16 %v686, %v686
        %v742 = vpack.c.bf16 %v689, %v689
        %v743 = vpack.c.bf16 %v691, %v691
        %v744 = vpack.c.bf16 %v694, %v694
        %v745 = vpack.c.bf16 %v696, %v696
        %746 = vst [vmem:[%s437] sm:$0xf] %v730
        %747 = vst [vmem:[%s437 + $0x4] sm:$0xf] %v731
        %748 = vst [vmem:[%s437 + $0x8] sm:$0xf] %v732
        %749 = vst [vmem:[%s437 + $0xc] sm:$0xf] %v733
        %750 = vst [vmem:[%s437 + $0x10] sm:$0xf] %v734
        %751 = vst [vmem:[%s437 + $0x14] sm:$0xf] %v735
        %752 = vst [vmem:[%s437 + $0x18] sm:$0xf] %v736
        %753 = vst [vmem:[%s437 + $0x1c] sm:$0xf] %v737
        %754 = vst [vmem:[%s437 + $0x20] sm:$0xf] %v738
        %755 = vst [vmem:[%s437 + $0x24] sm:$0xf] %v739
        %756 = vst [vmem:[%s437 + $0x28] sm:$0xf] %v740
        %757 = vst [vmem:[%s437 + $0x2c] sm:$0xf] %v741
        %758 = vst [vmem:[%s437 + $0x30] sm:$0xf] %v742
        %759 = vst [vmem:[%s437 + $0x34] sm:$0xf] %v743
        %760 = vst [vmem:[%s437 + $0x38] sm:$0xf] %v744
        %761 = vst [vmem:[%s437 + $0x3c] sm:$0xf] %v745
        %v762 = vld [vmem:[#allocation8] sm:$0xf]
        %v763 = vld [vmem:[#allocation8 + $0x4] sm:$0xf]
        %v764 = vld [vmem:[#allocation8 + $0x8] sm:$0xf]
        %v765 = vld [vmem:[#allocation8 + $0xc] sm:$0xf]
        %v766 = vld [vmem:[#allocation8 + $0x10] sm:$0xf]
        %v767 = vld [vmem:[#allocation8 + $0x14] sm:$0xf]
        %v768 = vld [vmem:[#allocation8 + $0x18] sm:$0xf]
        %v769 = vld [vmem:[#allocation8 + $0x1c] sm:$0xf]
        %v770 = vld [vmem:[#allocation8 + $0x20] sm:$0xf]
        %v771 = vld [vmem:[#allocation8 + $0x24] sm:$0xf]
        %v772 = vld [vmem:[#allocation8 + $0x28] sm:$0xf]
        %v773 = vld [vmem:[#allocation8 + $0x2c] sm:$0xf]
        %v774 = vld [vmem:[#allocation8 + $0x30] sm:$0xf]
        %v775 = vld [vmem:[#allocation8 + $0x34] sm:$0xf]
        %v776 = vld [vmem:[#allocation8 + $0x38] sm:$0xf]
        %v777 = vld [vmem:[#allocation8 + $0x3c] sm:$0xf]
        %v778 = vld [vmem:[%s5] sm:$0x1]
        %v780 = vperm.slane %v778, 0
        %v798 = vunpack.c.l.b16 %v762
        %v799 = vunpack.c.l.b16 %v763
        %v800 = vunpack.c.l.b16 %v764
        %v801 = vunpack.c.l.b16 %v765
        %v802 = vunpack.c.l.b16 %v766
        %v803 = vunpack.c.l.b16 %v767
        %v804 = vunpack.c.l.b16 %v768
        %v805 = vunpack.c.l.b16 %v769
        %v806 = vunpack.c.l.b16 %v770
        %v807 = vunpack.c.l.b16 %v771
        %v808 = vunpack.c.l.b16 %v772
        %v809 = vunpack.c.l.b16 %v773
        %v810 = vunpack.c.l.b16 %v774
        %v811 = vunpack.c.l.b16 %v775
        %v812 = vunpack.c.l.b16 %v776
        %v813 = vunpack.c.l.b16 %v777
        %v814 = vpack.c.b16 %v799, %v798
        %v815 = vpack.c.b16 %v801, %v800
        %v816 = vpack.c.b16 %v803, %v802
        %v817 = vpack.c.b16 %v805, %v804
        %v818 = vpack.c.b16 %v807, %v806
        %v819 = vpack.c.b16 %v809, %v808
        %v820 = vpack.c.b16 %v811, %v810
        %v821 = vpack.c.b16 %v813, %v812
        %830 = vmatpush.bf16.msra.mxu0 %v821
        %831 = vmatpush.bf16.msra.mxu0 %v820
        %832 = vmatpush.bf16.msra.mxu0 %v819
        %833 = vmatpush.bf16.msra.mxu0 %v818
        %834 = vmatpush.bf16.msra.mxu0 %v817
        %835 = vmatpush.bf16.msra.mxu0 %v816
        %836 = vmatpush.bf16.msra.mxu0 %v815
        %837 = vmatpush.bf16.msra.mxu0 %v814
        %838 = vmatmul.bf16.gmra.mxu0 %v490
        %v839 = vpop.f32.mrf.mxu0
        %v840 = vadd.f32 %v780, %v839
        %v841 = vpop.f32.mrf.mxu0
        %v842 = vadd.f32 %v780, %v841
        %843 = vmatmul.bf16.gmra.mxu0 %v491
        %v844 = vpop.f32.mrf.mxu0
        %v845 = vadd.f32 %v780, %v844
        %v846 = vpop.f32.mrf.mxu0
        %v847 = vadd.f32 %v780, %v846
        %848 = vmatmul.bf16.gmra.mxu0 %v492
        %v849 = vpop.f32.mrf.mxu0
        %v850 = vadd.f32 %v780, %v849
        %v851 = vpop.f32.mrf.mxu0
        %v852 = vadd.f32 %v780, %v851
        %853 = vmatmul.bf16.gmra.mxu0 %v493
        %v854 = vpop.f32.mrf.mxu0
        %v855 = vadd.f32 %v780, %v854
        %v856 = vpop.f32.mrf.mxu0
        %v857 = vadd.f32 %v780, %v856
        %858 = vmatmul.bf16.gmra.mxu0 %v494
        %v859 = vpop.f32.mrf.mxu0
        %v860 = vadd.f32 %v780, %v859
        %v861 = vpop.f32.mrf.mxu0
        %v862 = vadd.f32 %v780, %v861
        %863 = vmatmul.bf16.gmra.mxu0 %v495
        %v864 = vpop.f32.mrf.mxu0
        %v865 = vadd.f32 %v780, %v864
        %v866 = vpop.f32.mrf.mxu0
        %v867 = vadd.f32 %v780, %v866
        %868 = vmatmul.bf16.gmra.mxu0 %v496
        %v869 = vpop.f32.mrf.mxu0
        %v870 = vadd.f32 %v780, %v869
        %v871 = vpop.f32.mrf.mxu0
        %v872 = vadd.f32 %v780, %v871
        %873 = vmatmul.bf16.gmra.mxu0 %v497
        %v874 = vpop.f32.mrf.mxu0
        %v875 = vadd.f32 %v780, %v874
        %v876 = vpop.f32.mrf.mxu0
        %v877 = vadd.f32 %v780, %v876
        %878 = vdwg.mxu0
        %v879 = vpack.c.bf16 %v840, %v840
        %v880 = vpack.c.bf16 %v842, %v842
        %v881 = vpack.c.bf16 %v845, %v845
        %v882 = vpack.c.bf16 %v847, %v847
        %v883 = vpack.c.bf16 %v850, %v850
        %v884 = vpack.c.bf16 %v852, %v852
        %v885 = vpack.c.bf16 %v855, %v855
        %v886 = vpack.c.bf16 %v857, %v857
        %v887 = vpack.c.bf16 %v860, %v860
        %v888 = vpack.c.bf16 %v862, %v862
        %v889 = vpack.c.bf16 %v865, %v865
        %v890 = vpack.c.bf16 %v867, %v867
        %v891 = vpack.c.bf16 %v870, %v870
        %v892 = vpack.c.bf16 %v872, %v872
        %v893 = vpack.c.bf16 %v875, %v875
        %v894 = vpack.c.bf16 %v877, %v877
        %895 = vst [vmem:[%s444] sm:$0xf] %v879
        %896 = vst [vmem:[%s444 + $0x4] sm:$0xf] %v880
        %897 = vst [vmem:[%s444 + $0x8] sm:$0xf] %v881
        %898 = vst [vmem:[%s444 + $0xc] sm:$0xf] %v882
        %899 = vst [vmem:[%s444 + $0x10] sm:$0xf] %v883
        %900 = vst [vmem:[%s444 + $0x14] sm:$0xf] %v884
        %901 = vst [vmem:[%s444 + $0x18] sm:$0xf] %v885
        %902 = vst [vmem:[%s444 + $0x1c] sm:$0xf] %v886
        %903 = vst [vmem:[%s444 + $0x20] sm:$0xf] %v887
        %904 = vst [vmem:[%s444 + $0x24] sm:$0xf] %v888
        %905 = vst [vmem:[%s444 + $0x28] sm:$0xf] %v889
        %906 = vst [vmem:[%s444 + $0x2c] sm:$0xf] %v890
        %907 = vst [vmem:[%s444 + $0x30] sm:$0xf] %v891
        %908 = vst [vmem:[%s444 + $0x34] sm:$0xf] %v892
        %909 = vst [vmem:[%s444 + $0x38] sm:$0xf] %v893
        %910 = vst [vmem:[%s444 + $0x3c] sm:$0xf] %v894
        %s911 = sand.u32 %s195, 1
        %s912 = scalar_lea.sflag [#allocation4], %s911
        %s913 = sand.u32 %s195, 1
        %s914 = smul.addr %s913, 64
        %s915 = scalar_lea.vmem [#allocation10], %s914
        %s916 = sand.u32 %s33, 1
        %s917 = scalar_lea.sflag [#allocation12], %s916
        %s918 = sand.u32 %s223, 1
        %s919 = smul.addr %s918, 64
        %s920 = scalar_lea.vmem [#allocation11], %s919
        %s921 = sand.u32 %s33, 1
        %s922 = scalar_lea.sflag [#allocation12], %s921
        %s923 = sand.u32 %s251, 1
        %s924 = smul.addr %s923, 64
        %s925 = scalar_lea.vmem [#allocation13], %s924
        // Predicated region
        $region61: #{tpu_custom_call.1} parent=43 // pred_check
          %p926 = pneg %p205
        $region62: #{tpu_custom_call.1} parent=43 // pred_check_branch
          %928 = sbr.rel (%p926) target = $region64
        $region63: #{tpu_custom_call.1} parent=43 // pred_region
          %s929 = smul.u32 16, %s38
          %931 = vsyncadd %s912, 0
          %s932 = smul.addr %s37, 16
          %s933 = sadd.s32 %s929, %s932
          %s934 = smul.addr %s933, 4
          %s935 = scalar_lea.hbm %s6, %s934
          %s936 = sshll.u32 %s915, 4
          %s937 = int_to_ptr.vmem [resolvable:$true] %s936
          %s938 = sshll.u32 %s935, 4
          %s939 = int_to_ptr.hbm [resolvable:$true] %s938
          %944 = dma.vmem_to_hbm [thread:$0]  %s937, 1024, %s939, %s912, 64, 64, 4
        $region64: #{tpu_custom_call.1} parent=43 // pred_fallthru
          _
        // Predicated region
        $region65: #{tpu_custom_call.1} parent=43 // pred_check
          %p945 = pneg %p233
        $region66: #{tpu_custom_call.1} parent=43 // pred_check_branch
          %947 = sbr.rel (%p945) target = $region68
        $region67: #{tpu_custom_call.1} parent=43 // pred_region
          %s948 = smul.u32 16, %s38
          %950 = vsyncadd %s917, 0
          %s951 = smul.addr %s37, 16
          %s952 = sadd.s32 %s948, %s951
          %s953 = smul.addr %s952, 4
          %s954 = scalar_lea.hbm %s7, %s953
          %s955 = sshll.u32 %s920, 4
          %s956 = int_to_ptr.vmem [resolvable:$true] %s955
          %s957 = sshll.u32 %s954, 4
          %s958 = int_to_ptr.hbm [resolvable:$true] %s957
          %963 = dma.vmem_to_hbm [thread:$0]  %s956, 1024, %s958, %s917, 64, 64, 4
        $region68: #{tpu_custom_call.1} parent=43 // pred_fallthru
          _
        // Predicated region
        $region69: #{tpu_custom_call.1} parent=43 // pred_check
          %p964 = pneg %p261
        $region70: #{tpu_custom_call.1} parent=43 // pred_check_branch
          %966 = sbr.rel (%p964) target = $region72
        $region71: #{tpu_custom_call.1} parent=43 // pred_region
          %s967 = smul.u32 16, %s38
          %969 = vsyncadd %s922, 0
          %s970 = smul.addr %s37, 16
          %s971 = sadd.s32 %s967, %s970
          %s972 = smul.addr %s971, 4
          %s973 = scalar_lea.hbm %s8, %s972
          %s974 = sshll.u32 %s925, 4
          %s975 = int_to_ptr.vmem [resolvable:$true] %s974
          %s976 = sshll.u32 %s973, 4
          %s977 = int_to_ptr.hbm [resolvable:$true] %s976
          %982 = dma.vmem_to_hbm [thread:$0]  %s975, 1024, %s977, %s922, 64, 64, 4
        $region72: #{tpu_custom_call.1} parent=43 // pred_fallthru
          _
      $region44: #{tpu_custom_call.1} parent=5 // pred_fallthru
        _
      %p983 = scmp.le.s32.totalorder 2, %s28
      // Predicated region
      $region73: #{tpu_custom_call.1} parent=5 // pred_check
        %p984 = pneg %p983
      $region74: #{tpu_custom_call.1} parent=5 // pred_check_branch
        %986 = sbr.rel (%p984) target = $region76
      $region75: #{tpu_custom_call.1} parent=5 // pred_region
        %s987 = ssub.s32 %s28, 2
        // Predicated region
        $region77: #{tpu_custom_call.1} parent=75 // pred_check
          %p988 = pneg %p211
        $region78: #{tpu_custom_call.1} parent=75 // pred_check_branch
          %990 = sbr.rel (%p988) target = $region80
        $region79: #{tpu_custom_call.1} parent=75 // pred_region
          %s991 = sand.u32 %s196, 1
          %s992 = scalar_lea.sflag [#allocation4], %s991
          %s993 = sand.u32 %s196, 1
          %s994 = smul.addr %s993, 64
          %s995 = scalar_lea.vmem [#allocation10], %s994
          %997 = dma.done %s992, 1024
        $region80: #{tpu_custom_call.1} parent=75 // pred_fallthru
          _
        // Predicated region
        $region81: #{tpu_custom_call.1} parent=75 // pred_check
          %p998 = pneg %p239
        $region82: #{tpu_custom_call.1} parent=75 // pred_check_branch
          %1000 = sbr.rel (%p998) target = $region84
        $region83: #{tpu_custom_call.1} parent=75 // pred_region
          %s1001 = sand.u32 %s34, 1
          %s1002 = scalar_lea.sflag [#allocation12], %s1001
          %s1003 = sand.u32 %s224, 1
          %s1004 = smul.addr %s1003, 64
          %s1005 = scalar_lea.vmem [#allocation11], %s1004
          %1007 = dma.done %s1002, 1024
        $region84: #{tpu_custom_call.1} parent=75 // pred_fallthru
          _
        // Predicated region
        $region85: #{tpu_custom_call.1} parent=75 // pred_check
          %p1008 = pneg %p267
        $region86: #{tpu_custom_call.1} parent=75 // pred_check_branch
          %1010 = sbr.rel (%p1008) target = $region88
        $region87: #{tpu_custom_call.1} parent=75 // pred_region
          %s1011 = sand.u32 %s34, 1
          %s1012 = scalar_lea.sflag [#allocation12], %s1011
          %s1013 = sand.u32 %s252, 1
          %s1014 = smul.addr %s1013, 64
          %s1015 = scalar_lea.vmem [#allocation13], %s1014
          %1017 = dma.done %s1012, 1024
        $region88: #{tpu_custom_call.1} parent=75 // pred_fallthru
          _
      $region76: #{tpu_custom_call.1} parent=5 // pred_fallthru
        _
    $region6: #{tpu_custom_call.1} parent=1 // loop_footer
      %s32 = sadd.s32 1, %s28
    $region7: #{tpu_custom_call.1} parent=1 // loop_footer_branch
      %27 = sbr.rel target = $region3
    $region8: #{tpu_custom_call.1} parent=1 // loop_exit
      _
    %1018 = vsyncpa [#allocation3], 1
    %s1019 = scalar_lea.sflag [#allocation3], 1
    %1020 = vsyncpa %s1019, 1
    %1021 = vsyncpa [#allocation6], 1
    %s1022 = scalar_lea.sflag [#allocation6], 1
    %1023 = vsyncpa %s1022, 1
    %1024 = vsyncpa [#allocation9], 1
    %1025 = vsyncpa [#allocation4], 1
    %s1026 = scalar_lea.sflag [#allocation4], 1
    %1027 = vsyncpa %s1026, 1
    %1028 = vsyncpa [#allocation12], 1
    %s1029 = scalar_lea.sflag [#allocation12], 1
    %1030 = vsyncpa %s1029, 1

</llo_original>
